<compile_context>
chip_gen: v5e
topology: v5e:2x2
jax: 0.10.0
libtpu: 0.0.40
codegen_flags: <defaults>
</compile_context>

<pallas_src>
from functools import partial

import jax
import jax.numpy as jnp
from jax.experimental import pallas as pl
from jax.experimental.pallas import tpu as pltpu


def mlp_kernel(x_ref, p_ref, o_ref):
    # x_ref: (2, TN)  -- features on sublanes, batch on the 128-lane axis.
    # p_ref: (10, 16) -- packed weights/biases (see pack_params).
    # o_ref: (1, TN)  -- lane-dense output tile.
    p = p_ref[...]

    x0 = x_ref[0:1, :]                      # (1, TN)
    x1 = x_ref[1:2, :]                      # (1, TN)

    # Layer 1 + ReLU on the VPU (contraction dim 2 is far too small for MXU):
    #   h1[j, n] = w1[j,0]*x0[n] + w1[j,1]*x1[n] + b1[j]
    w1c0 = p[:, 0:1]                        # (10, 1)
    w1c1 = p[:, 1:2]                        # (10, 1)
    b1 = p[:, 13:14]                        # (10, 1)
    h1 = jnp.maximum(w1c0 * x0 + w1c1 * x1 + b1, 0.0)          # (10, TN)

    # Layer 2 + ReLU on the MXU: (10,10) @ (10,TN) -> (10,TN)
    w2 = p[:, 2:12]                         # (10, 10)
    b2 = p[:, 14:15]                        # (10, 1)
    h2 = jnp.maximum(
        jnp.dot(w2, h1, preferred_element_type=jnp.float32) + b2, 0.0)

    # Layer 3 (no activation): (1,10) @ (10,TN) as VPU multiply + sublane sum.
    w3t = p[:, 12:13]                       # (10, 1)
    b3 = p[0:1, 15:16]                      # (1, 1)
    out = jnp.sum(w3t * h2, axis=0, keepdims=True) + b3         # (1, TN)
    o_ref[...] = out.astype(o_ref.dtype)


def _round_up(n, m):
    return ((n + m - 1) // m) * m


def pack_params(params):
    """Pack W1,b1,W2,b2,W3,b3 into a single (10,16) f32 array (one const DMA)."""
    w1, b1, w2, b2, w3, b3 = params
    p = jnp.zeros((10, 16), jnp.float32)
    p = p.at[:, 0:2].set(w1)                # W1 (10,2)
    p = p.at[:, 2:12].set(w2)               # W2 (10,10)
    p = p.at[:, 12].set(w3[0, :])           # W3 (1,10) stored as a column
    p = p.at[:, 13].set(b1[:, 0])           # b1 (10,1)
    p = p.at[:, 14].set(b2[:, 0])           # b2 (10,1)
    p = p.at[0, 15].set(b3[0, 0])           # b3 (1,1)
    return p


@partial(jax.jit, static_argnames=("tile_n",))
def nonlinear_model(x, params, *, tile_n=32768):
    """x: (N, 2) float32 -> (N, 1) float32. Fused 3-layer MLP in one Pallas kernel.

    tile_n is the batch-tile width on the lane axis (rounded to a multiple of
    128).  Default 32768 keeps the double-buffered VMEM footprint well under
    the 32 MiB scoped limit used below (safe on v5e/v6e/v7x); sweep upward on
    v6e (128 MiB physical) if desired.
    """
    w1, b1, w2, b2, w3, b3 = params
    n, f = x.shape
    assert f == 2

    # Batch lives on the lane axis; tile must be a multiple of 128 (defensive
    # rounding so odd tile_n values can't violate the (8,128) constraint).
    tn = _round_up(max(1, min(tile_n, n)), 128)
    n_pad = _round_up(n, 128)

    # Single fused transpose (+ small tail pad) -- no full zero slab.
    xt = x.T                                       # (2, N)
    if n_pad != n:
        xt = jnp.pad(xt, ((0, 0), (0, n_pad - n)))

    packed = pack_params((w1, b1, w2, b2, w3, b3))

    out = pl.pallas_call(
        mlp_kernel,
        out_shape=jax.ShapeDtypeStruct((1, n_pad), jnp.float32),
        grid=(pl.cdiv(n_pad, tn),),                # ragged final block is OK
        in_specs=[
            pl.BlockSpec((2, tn), lambda i: (0, i)),    # x tile: batch on lanes
            pl.BlockSpec((10, 16), lambda i: (0, 0)),   # packed weights, resident
        ],
        out_specs=pl.BlockSpec((1, tn), lambda i: (0, i)),  # lane-dense output
        compiler_params=pltpu.CompilerParams(
            dimension_semantics=("parallel",),          # v7x: split across 2 TCs
            vmem_limit_bytes=32 * 1024 * 1024,          # safe on v5e/v6e/v7x
        ),
    )(xt, packed)

    return out[:, :n].T  # (N, 1)


def init_params(key):
    """Deterministic init matching PyTorch nn.Linear shapes.

    Weights are in PyTorch's (out_features, in_features) layout; biases are
    (out_features, 1).
    """
    ks = jax.random.split(key, 6)

    def linear(kw, kb, fan_in, fan_out):
        bound = 1.0 / jnp.sqrt(fan_in)
        w = jax.random.uniform(kw, (fan_out, fan_in), jnp.float32, -bound, bound)
        b = jax.random.uniform(kb, (fan_out, 1), jnp.float32, -bound, bound)
        return w, b

    w1, b1 = linear(ks[0], ks[1], 2, 10)
    w2, b2 = linear(ks[2], ks[3], 10, 10)
    w3, b3 = linear(ks[4], ks[5], 10, 1)
    return (w1, b1, w2, b2, w3, b3)


def reference(x, params):
    w1, b1, w2, b2, w3, b3 = params
    h1 = jnp.maximum(x @ w1.T + b1.T, 0.0)
    h2 = jnp.maximum(h1 @ w2.T + b2.T, 0.0)
    return h2 @ w3.T + b3.T


if __name__ == "__main__":
    key = jax.random.PRNGKey(0)
    k_x, k_x2, k_p = jax.random.split(key, 3)
    params = init_params(k_p)

    # Small batch consistent with the module: (N, 2) -> (N, 1).
    x_small = jax.random.normal(k_x, (8, 2), jnp.float32)
    out_small = jax.block_until_ready(nonlinear_model(x_small, params))
    assert out_small.shape == (8, 1)
    assert jnp.allclose(out_small, reference(x_small, params), atol=1e-5, rtol=1e-5)

    # Multi-tile case: exercises the batch grid, tail padding, and the ragged
    # final block (2500 is not a multiple of 1024).
    x_big = jax.random.normal(k_x2, (2500, 2), jnp.float32)
    out_big = jax.block_until_ready(nonlinear_model(x_big, params, tile_n=1024))
    assert out_big.shape == (2500, 1)
    assert jnp.allclose(out_big, reference(x_big, params), atol=1e-5, rtol=1e-5)

    print("KERNEL_OK")
</pallas_src>

<mosaic_0001>
module attributes {stable_mosaic.version = 11 : i64} {
  func.func @mlp_kernel(%arg0: i32, %arg1: memref<2x128xf32, #tpu.memory_space<vmem>>, %arg2: memref<10x16xf32, #tpu.memory_space<vmem>>, %arg3: memref<1x128xf32, #tpu.memory_space<vmem>>) attributes {dimension_semantics = [#tpu.dimension_semantics<parallel>], iteration_bounds = array<i64: 1>, scalar_prefetch = 0 : i64, scratch_operands = 0 : i64, tpu.core_type = #tpu.core_type<tc>, window_params = [{transform_indices = @transform_0, window_bounds = array<i64: 2, 128>}, {pipeline_mode = #tpu.pipeline_mode<synchronous>, transform_indices = @transform_1, window_bounds = array<i64: 10, 16>}, {transform_indices = @transform_2, window_bounds = array<i64: 1, 128>}]} {
    %c0 = arith.constant 0 : index
    %c0_0 = arith.constant 0 : index
    %0 = vector.load %arg2[%c0, %c0_0] : memref<10x16xf32, #tpu.memory_space<vmem>>, vector<10x16xf32>
    %c0_1 = arith.constant 0 : index
    %c0_2 = arith.constant 0 : index
    %1 = vector.load %arg1[%c0_1, %c0_2] : memref<2x128xf32, #tpu.memory_space<vmem>>, vector<1x128xf32>
    %c1 = arith.constant 1 : index
    %c0_3 = arith.constant 0 : index
    %2 = vector.load %arg1[%c1, %c0_3] : memref<2x128xf32, #tpu.memory_space<vmem>>, vector<1x128xf32>
    %3 = vector.extract_strided_slice %0 {offsets = [0, 0], sizes = [10, 1], strides = [1, 1]} : vector<10x16xf32> to vector<10x1xf32>
    %4 = vector.extract_strided_slice %0 {offsets = [0, 1], sizes = [10, 1], strides = [1, 1]} : vector<10x16xf32> to vector<10x1xf32>
    %5 = vector.extract_strided_slice %0 {offsets = [0, 13], sizes = [10, 1], strides = [1, 1]} : vector<10x16xf32> to vector<10x1xf32>
    %6 = vector.broadcast %3 : vector<10x1xf32> to vector<10x128xf32>
    %7 = vector.broadcast %1 : vector<1x128xf32> to vector<10x128xf32>
    %8 = arith.mulf %6, %7 : vector<10x128xf32>
    %9 = vector.broadcast %4 : vector<10x1xf32> to vector<10x128xf32>
    %10 = vector.broadcast %2 : vector<1x128xf32> to vector<10x128xf32>
    %11 = arith.mulf %9, %10 : vector<10x128xf32>
    %12 = arith.addf %8, %11 : vector<10x128xf32>
    %13 = vector.broadcast %5 : vector<10x1xf32> to vector<10x128xf32>
    %14 = arith.addf %12, %13 : vector<10x128xf32>
    %cst = arith.constant 0.000000e+00 : f32
    %15 = vector.broadcast %cst : f32 to vector<10x128xf32>
    %16 = arith.maximumf %14, %15 : vector<10x128xf32>
    %17 = vector.extract_strided_slice %0 {offsets = [0, 2], sizes = [10, 10], strides = [1, 1]} : vector<10x16xf32> to vector<10x10xf32>
    %18 = vector.extract_strided_slice %0 {offsets = [0, 14], sizes = [10, 1], strides = [1, 1]} : vector<10x16xf32> to vector<10x1xf32>
    %cst_4 = arith.constant dense<0.000000e+00> : vector<10x128xf32>
    %19 = tpu.matmul %17, %16, %cst_4 {dimension_numbers = #tpu.dot_dimension_numbers<[1], [0], [0], [1], [0, 0, 1, 1], [], []>} : vector<10x10xf32>, vector<10x128xf32>, vector<10x128xf32> -> vector<10x128xf32>
    %20 = vector.broadcast %18 : vector<10x1xf32> to vector<10x128xf32>
    %21 = arith.addf %19, %20 : vector<10x128xf32>
    %cst_5 = arith.constant 0.000000e+00 : f32
    %22 = vector.broadcast %cst_5 : f32 to vector<10x128xf32>
    %23 = arith.maximumf %21, %22 : vector<10x128xf32>
    %24 = vector.extract_strided_slice %0 {offsets = [0, 12], sizes = [10, 1], strides = [1, 1]} : vector<10x16xf32> to vector<10x1xf32>
    %25 = vector.extract_strided_slice %0 {offsets = [0, 15], sizes = [1, 1], strides = [1, 1]} : vector<10x16xf32> to vector<1x1xf32>
    %26 = vector.broadcast %24 : vector<10x1xf32> to vector<10x128xf32>
    %27 = arith.mulf %26, %23 : vector<10x128xf32>
    %cst_6 = arith.constant dense<0.000000e+00> : vector<128xf32>
    %28 = vector.multi_reduction <add>, %27, %cst_6 [0] : vector<10x128xf32> to vector<128xf32>
    %29 = vector.shape_cast %28 : vector<128xf32> to vector<1x128xf32>
    %30 = vector.broadcast %25 : vector<1x1xf32> to vector<1x128xf32>
    %31 = arith.addf %29, %30 : vector<1x128xf32>
    %c0_7 = arith.constant 0 : index
    %c0_8 = arith.constant 0 : index
    %32 = vector.load %arg3[%c0_7, %c0_8] : memref<1x128xf32, #tpu.memory_space<vmem>>, vector<1x128xf32>
    tpu.vector_store %arg3[%c0_7, %c0_8], %31 {strides = array<i32>} : memref<1x128xf32, #tpu.memory_space<vmem>>, vector<1x128xf32>,
    return
  }
  func.func @transform_0(%arg0: i32) -> (i32, i32) {
    %c0_i32 = arith.constant 0 : i32
    %c0_i32_0 = arith.constant 0 : i32
    return %c0_i32, %arg0 : i32, i32
  }
  func.func @transform_1(%arg0: i32) -> (i32, i32) {
    %c0_i32 = arith.constant 0 : i32
    %c0_i32_0 = arith.constant 0 : i32
    %c0_i32_1 = arith.constant 0 : i32
    return %c0_i32, %c0_i32_0 : i32, i32
  }
  func.func @transform_2(%arg0: i32) -> (i32, i32) {
    %c0_i32 = arith.constant 0 : i32
    %c0_i32_0 = arith.constant 0 : i32
    return %c0_i32, %arg0 : i32, i32
  }
}

</mosaic_0001>

<llo_original>
// kernel: nonlinear_model.1
$region0: #{nonlinear_model.1}
  #allocation0 [shape = 'u32[]', space=smem, size = 0x4, offset = 0x4, fixed_abs, tag = 'smem constant byte address 0x4 - core index']
  #allocation1 [shape = 'u32[72,128]{1,0:T(1,128)}', space=vmem, size = 0x9000, scoped, tag = 'internal scratch']
  %s0 = inlined_call_operand.vmem [shape: f32[2,128], index: 0, kind: input, shape index: {}]
  %s1 = inlined_call_operand.vmem [shape: f32[10,16], index: 1, kind: input, shape index: {}]
  %s2 = inlined_call_operand.vmem [shape: f32[1,128], index: 2, kind: output, shape index: {}]
  %s3 = sld [smem:[#allocation0]]
  $region18: #{nonlinear_model.1} parent=0
    _
  %s5 = ssub.s32 1, %s3
  %s6 = scalar_select 0, %s5, %s3
  // Predicated region
  $region2: #{nonlinear_model.1} parent=0 // pred_check
    _
  $region3: #{nonlinear_model.1} parent=0 // pred_check_branch
    %8 = sbr.rel (0) target = $region5
  $region4: #{nonlinear_model.1} parent=0 // pred_region
    _
  $region5: #{nonlinear_model.1} parent=0 // pred_fallthru
    _
  // Predicated region
  $region6: #{nonlinear_model.1} parent=0 // pred_check
    _
  $region7: #{nonlinear_model.1} parent=0 // pred_check_branch
    %10 = sbr.rel (0) target = $region9
  $region8: #{nonlinear_model.1} parent=0 // pred_region
    _
  $region9: #{nonlinear_model.1} parent=0 // pred_fallthru
    _
  %v11 = vld [vmem:[%s1] sm:$0xff]
  %v12 = vld [vmem:[%s1 + $0x8] sm:$0x3]
  %v13 = vld [vmem:[%s0] sm:$0x1]
  %v14 = vld [vmem:[%s0 + $0x1] sm:$0x1]
  %16 = vset.pattern.permute.xlu0 0
  %17 = vperm.xlu0 %16, %v11
  %v18 = vpop.permute.xlu0 %17
  %21 = vset.pattern.permute.xlu0 0
  %22 = vperm.xlu0 %21, %v12
  %v23 = vpop.permute.xlu0 %22
  %v25 = vperm.slane %v13, 0
  %v26 = vmul.f32 %v18, %v25
  %v27 = vmul.f32 %v23, %v25
  %28 = vset.pattern.permute.xlu0 1
  %29 = vperm.xlu0 %28, %v11
  %v30 = vpop.permute.xlu0 %29
  %32 = vset.pattern.permute.xlu0 1
  %33 = vperm.xlu0 %32, %v12
  %v34 = vpop.permute.xlu0 %33
  %v36 = vperm.slane %v14, 0
  %v37 = vmul.f32 %v30, %v36
  %v38 = vmul.f32 %v34, %v36
  %v39 = vadd.f32 %v26, %v37
  %v40 = vadd.f32 %v27, %v38
  %41 = vset.pattern.permute.xlu0 13
  %42 = vperm.xlu0 %41, %v11
  %v43 = vpop.permute.xlu0 %42
  %45 = vset.pattern.permute.xlu0 13
  %46 = vperm.xlu0 %45, %v12
  %v47 = vpop.permute.xlu0 %46
  %v49 = vadd.f32 %v39, %v43
  %v50 = vadd.f32 %v40, %v47
  %v51 = vmax.f32 %v49, 0.0
  %v52 = vmax.f32 %v50, 0.0
  %53 = vset.pattern.permute.xlu0 14
  %54 = vperm.xlu0 %53, %v11
  %v55 = vpop.permute.xlu0 %54
  %57 = vset.pattern.permute.xlu0 14
  %58 = vperm.xlu0 %57, %v12
  %v59 = vpop.permute.xlu0 %58
  %61 = vrot.lane.b32.xlu0 %v11, 126
  %v62 = vpop.permute.xlu0 %61
  %63 = vrot.lane.b32.xlu0 %v12, 126
  %v64 = vpop.permute.xlu0 %63
  %vm65 = vcmask 80896
  %v66 = vsel %vm65, %v62, 0
  %v68 = vsel %vm65, %v64, 0
  %vm70 = vcmask 1041408
  %v72 = vsel %vm70, %v52, 0
  %74 = vmatpush.msra.mxu0 0.0
  %75 = vmatpush.msra.mxu0 0.0
  %76 = vmatpush.msra.mxu0 0.0
  %77 = vmatpush.msra.mxu0 0.0
  %78 = vmatpush.msra.mxu0 0.0
  %79 = vmatpush.msra.mxu0 0.0
  %80 = vmatpush.msra.mxu0 0.0
  %81 = vmatpush.msra.mxu0 0.0
  %82 = vmatpush.msra.mxu0 0.0
  %83 = vmatpush.msra.mxu0 0.0
  %84 = vmatpush.msra.mxu0 0.0
  %85 = vmatpush.msra.mxu0 0.0
  %86 = vmatpush.msra.mxu0 0.0
  %87 = vmatpush.msra.mxu0 0.0
  %88 = vmatpush.msra.mxu0 %v72
  %89 = vmatpush.msra.mxu0 %v51
  %90 = vmatmul.f32.gmra.mxu0 %v66
  %v91 = vpop.f32.mrf.mxu0
  %v92 = vadd.f32 %v55, %v91
  %93 = vmatmul.f32.gmra.mxu0 %v68
  %v94 = vpop.f32.mrf.mxu0
  %v95 = vadd.f32 %v59, %v94
  %96 = vdwg.mxu0
  %v97 = vmax.f32 %v92, 0.0
  %v98 = vmax.f32 %v95, 0.0
  %99 = vset.pattern.permute.xlu0 12
  %100 = vperm.xlu0 %99, %v11
  %v101 = vpop.permute.xlu0 %100
  %103 = vset.pattern.permute.xlu0 12
  %104 = vperm.xlu0 %103, %v12
  %v105 = vpop.permute.xlu0 %104
  %v107 = vmul.f32 %v101, %v97
  %v108 = vmul.f32 %v105, %v98
  %v109 = vsel %vm70, %v108, 0.0
  %v110 = vadd.f32 %v107, %v109
  %v111 = vrot.slane %v110, 4
  %v112 = vadd.f32 %v110, %v111
  %v113 = vrot.slane %v112, 2
  %v114 = vadd.f32 %v112, %v113
  %v115 = vrot.slane %v114, 1
  %v116 = vadd.f32 %v114, %v115
  %117 = vset.pattern.permute.xlu0 15
  %118 = vperm.xlu0 %117, %v11
  %v119 = vpop.permute.xlu0 %118
  %v121 = vadd.f32 %v116, %v119
  %122 = vst [vmem:[%s2] sm:$0x1] %v121
  // Predicated region
  $region10: #{nonlinear_model.1} parent=0 // pred_check
    _
  $region11: #{nonlinear_model.1} parent=0 // pred_check_branch
    %124 = sbr.rel (0) target = $region13
  $region12: #{nonlinear_model.1} parent=0 // pred_region
    _
  $region13: #{nonlinear_model.1} parent=0 // pred_fallthru
    _
  // Predicated region
  $region14: #{nonlinear_model.1} parent=0 // pred_check
    _
  $region15: #{nonlinear_model.1} parent=0 // pred_check_branch
    %126 = sbr.rel (0) target = $region17
  $region16: #{nonlinear_model.1} parent=0 // pred_region
    _
  $region17: #{nonlinear_model.1} parent=0 // pred_fallthru
    _

</llo_original>
